<compile_context>
chip_gen: v5e
topology: v5e:2x2
jax: 0.10.0
libtpu: 0.0.40
codegen_flags: <defaults>
</compile_context>

<pallas_src>
import math
import functools

import jax
import jax.numpy as jnp
from jax import lax
from jax.experimental import pallas as pl
from jax.experimental.pallas import tpu as pltpu


_EPS = 1e-6
_NEG_INF = -1e9


# ----------------------------------------------------------------------------
# Tiling / budget policy (generation aware)
# ----------------------------------------------------------------------------

def _vmem_limit_bytes():
    """Scoped-VMEM budget: v5e/v6e have 128 MiB physical VMEM, v7x only 64 MiB."""
    try:
        cap = int(pltpu.get_tpu_info().vmem_capacity_bytes)
    except Exception:  # conservative fallback (fits every generation)
        cap = 64 * 1024 * 1024
    if cap >= 100 * 1024 * 1024:      # v5e / v6e
        return 96 * 1024 * 1024
    return 40 * 1024 * 1024           # v7x


def _choose_q_tile(seq_len, vmem_limit):
    """Return (tile, padded_seq_len).  Pads instead of one huge fallback tile."""
    max_tile = 512 if vmem_limit >= 64 * 1024 * 1024 else 256
    if seq_len <= max_tile:
        return seq_len, seq_len
    padded = ((seq_len + max_tile - 1) // max_tile) * max_tile
    return max_tile, padded


def _choose_ff_tile(d_ff):
    if d_ff <= 512:
        return d_ff
    for t in (512, 256, 128):
        if d_ff % t == 0:
            return t
    return d_ff  # TODO(synk): pad d_ff for sizes not divisible by 128.


# ----------------------------------------------------------------------------
# Shared in-kernel epilogue
# ----------------------------------------------------------------------------

def _residual_layer_norm(x, y, gamma, beta, eps):
    """LayerNorm(x + y) matching the PyTorch module (unbiased std, /(std + eps))."""
    r = x + y
    mean = jnp.mean(r, axis=-1, keepdims=True)
    d = r - mean
    var = jnp.sum(d * d, axis=-1, keepdims=True) / (r.shape[-1] - 1)
    inv = pl.reciprocal(jnp.sqrt(var) + eps, approx=True)   # EUP slot, not a VALU divide
    return gamma * d * inv + beta


# ----------------------------------------------------------------------------
# Kernels
# ----------------------------------------------------------------------------

def _attn_sublayer_kernel(xq_ref, xkv_ref, kmask_ref,
                          wq_ref, bq_ref, wkv_ref, bkv_ref, wo_ref, bo_ref,
                          gamma_ref, beta_ref,
                          o_ref, kv_ref, *, h, d_k, scale, causal, eps):
    """One (batch, query-tile) grid step.

    xq_ref   : [TQ, D]    f32  query-side activations (also the residual input)
    xkv_ref  : [Skv, D]   bf16 key/value-side activations (full sequence)
    kmask_ref: [1, Skv]   f32  key mask (1 = keep, 0 = masked_fill(-1e9))
    wq_ref   : [D, D] bf16 ; wkv_ref: [D, 2D] bf16 (K|V fused) ; wo_ref: [D, D] bf16
    b*_ref   : f32 biases ; gamma/beta : [1, D] LayerNorm params
    o_ref    : [TQ, D]    output tile = LayerNorm(xq + attention(xq, xkv, xkv))
    kv_ref   : [Skv, 2D]  bf16 VMEM scratch (K|V projection hoisted over query tiles)
    """
    D = h * d_k
    TQ = xq_ref.shape[0]
    Skv = xkv_ref.shape[0]
    qi = pl.program_id(1)

    # K|V projection once per batch element (qi axis is "arbitrary": sequential).
    @pl.when(qi == 0)
    def _():
        kv = jnp.dot(xkv_ref[...], wkv_ref[...],
                     preferred_element_type=jnp.float32) + bkv_ref[...]
        kv_ref[...] = kv.astype(jnp.bfloat16)

    xq = xq_ref[...]
    q = jnp.dot(xq.astype(jnp.bfloat16), wq_ref[...],
                preferred_element_type=jnp.float32) + bq_ref[...]

    # Head-major [h, ., d_k] layout; all heads go through ONE batched dot_general.
    qh = jnp.transpose(q.astype(jnp.bfloat16).reshape(TQ, h, d_k), (1, 0, 2))
    kh = jnp.transpose(kv_ref[:, :D].reshape(Skv, h, d_k), (1, 0, 2))
    vh = jnp.transpose(kv_ref[:, D:].reshape(Skv, h, d_k), (1, 0, 2))

    scores = lax.dot_general(qh, kh, (((2,), (2,)), ((0,), (0,))),
                             preferred_element_type=jnp.float32) * scale   # [h,TQ,Skv]

    # Mask generated / broadcast in-kernel (no [B,Sq,Skv] mask DMA).
    keep = (kmask_ref[...] > 0.0)[None, :, :]                 # [1, 1, Skv]
    if causal:
        row = qi * TQ + lax.broadcasted_iota(jnp.int32, (TQ, Skv), 0)
        col = lax.broadcasted_iota(jnp.int32, (TQ, Skv), 1)
        keep = jnp.logical_and(keep, (col <= row)[None, :, :])  # [1, TQ, Skv]
    scores = jnp.where(keep, scores, _NEG_INF)

    # f32 softmax (v5e-safe) with EUP approx reciprocal for the denominator.
    m = jnp.max(scores, axis=-1, keepdims=True)
    e = jnp.exp(scores - m)
    p = e * pl.reciprocal(jnp.sum(e, axis=-1, keepdims=True), approx=True)

    ctx = lax.dot_general(p.astype(jnp.bfloat16), vh, (((2,), (1,)), ((0,), (0,))),
                          preferred_element_type=jnp.float32)              # [h,TQ,d_k]
    ctx = jnp.transpose(ctx, (1, 0, 2)).reshape(TQ, D)

    # Output projection + residual + LayerNorm epilogue, fused in-kernel.
    y = jnp.dot(ctx.astype(jnp.bfloat16), wo_ref[...],
                preferred_element_type=jnp.float32) + bo_ref[...]
    out = _residual_layer_norm(xq.astype(jnp.float32), y,
                               gamma_ref[...], beta_ref[...], eps)
    o_ref[...] = out.astype(o_ref.dtype)


def _ffn_sublayer_kernel(x_ref, w1_ref, b1_ref, w2_ref, b2_ref,
                         gamma_ref, beta_ref, o_ref, acc_ref, *, eps):
    """LayerNorm(x + W2(relu(W1 x + b1)) + b2), hidden dim tiled over the last grid axis."""
    f = pl.program_id(2)
    nf = pl.num_programs(2)

    @pl.when(f == 0)
    def _():
        acc_ref[...] = jnp.zeros_like(acc_ref)

    x = x_ref[...]
    hdn = jnp.dot(x.astype(jnp.bfloat16), w1_ref[...],
                  preferred_element_type=jnp.float32) + b1_ref[...]
    hdn = jnp.maximum(hdn, 0.0)
    acc_ref[...] += jnp.dot(hdn.astype(jnp.bfloat16), w2_ref[...],
                            preferred_element_type=jnp.float32)

    @pl.when(f == nf - 1)
    def _():
        y = acc_ref[...] + b2_ref[...]
        out = _residual_layer_norm(x.astype(jnp.float32), y,
                                   gamma_ref[...], beta_ref[...], eps)
        o_ref[...] = out.astype(o_ref.dtype)


# ----------------------------------------------------------------------------
# Wrappers (pallas_call setup)
# ----------------------------------------------------------------------------

def attention_sublayer(xq, xkv, attn_params, ln_params, *, h,
                       key_mask=None, causal=False, eps=_EPS):
    """LayerNorm(xq + MHA(xq, xkv, xkv)).

    key_mask : optional [B, Skv] (1 = keep, 0 = mask) padding mask, broadcast in-kernel.
    causal   : apply an in-kernel lower-triangular mask (generated from iota, never DMA'd).
    """
    B, Sq, D = xq.shape
    _, Skv, _ = xkv.shape
    assert D % h == 0
    d_k = D // h

    vmem_limit = _vmem_limit_bytes()
    TQ, Sq_pad = _choose_q_tile(Sq, vmem_limit)
    if Sq_pad != Sq:
        xq = jnp.pad(xq, ((0, 0), (0, Sq_pad - Sq), (0, 0)))
    n_qt = Sq_pad // TQ

    if key_mask is None:
        key_mask = jnp.ones((B, Skv), jnp.float32)
    kmask = key_mask.astype(jnp.float32).reshape(B, 1, Skv)

    # xkv and weights are pure MXU operands -> ship them as bf16 (halves their DMA).
    xkv_b = xkv.astype(jnp.bfloat16)
    wq = attn_params["wq"].astype(jnp.bfloat16)
    wkv = attn_params["wkv"].astype(jnp.bfloat16)
    wo = attn_params["wo"].astype(jnp.bfloat16)
    bq, bkv, bo = attn_params["bq"], attn_params["bkv"], attn_params["bo"]
    gamma, beta = ln_params["gamma"], ln_params["beta"]

    kernel = functools.partial(_attn_sublayer_kernel, h=h, d_k=d_k,
                               scale=1.0 / math.sqrt(d_k), causal=causal, eps=eps)

    flops = B * (2 * Sq_pad * D * D              # Q projection
                 + 2 * Skv * D * 2 * D           # fused K/V projection (once per batch)
                 + 2 * Sq_pad * Skv * D          # QK^T (all heads)
                 + 2 * Sq_pad * Skv * D          # PV
                 + 2 * Sq_pad * D * D)           # output projection
    bytes_accessed = (4 * 2 * B * Sq_pad * D + 2 * B * Skv * D + 4 * B * Skv
                      + 2 * (wq.size + wkv.size + wo.size)
                      + 4 * (bq.size + bkv.size + bo.size + gamma.size + beta.size))
    cost = pl.CostEstimate(flops=int(flops),
                           transcendentals=int(B * h * Sq_pad * Skv),
                           bytes_accessed=int(bytes_accessed))

    const = lambda b, qi: (0, 0)
    out = pl.pallas_call(
        kernel,
        out_shape=jax.ShapeDtypeStruct((B, Sq_pad, D), xq.dtype),
        grid_spec=pltpu.PrefetchScalarGridSpec(
            num_scalar_prefetch=0,
            grid=(B, n_qt),
            in_specs=[
                pl.BlockSpec((None, TQ, D), lambda b, qi: (b, qi, 0)),   # xq
                pl.BlockSpec((None, Skv, D), lambda b, qi: (b, 0, 0)),   # xkv (bf16)
                pl.BlockSpec((None, 1, Skv), lambda b, qi: (b, 0, 0)),   # key mask
                pl.BlockSpec((D, D), const),                             # wq
                pl.BlockSpec((1, D), const),                             # bq
                pl.BlockSpec((D, 2 * D), const),                         # wkv
                pl.BlockSpec((1, 2 * D), const),                         # bkv
                pl.BlockSpec((D, D), const),                             # wo
                pl.BlockSpec((1, D), const),                             # bo
                pl.BlockSpec((1, D), const),                             # gamma
                pl.BlockSpec((1, D), const),                             # beta
            ],
            out_specs=pl.BlockSpec((None, TQ, D), lambda b, qi: (b, qi, 0)),
            scratch_shapes=[pltpu.VMEM((Skv, 2 * D), jnp.bfloat16)],     # hoisted K|V
        ),
        compiler_params=pltpu.CompilerParams(
            # qi must be sequential ("arbitrary") so the K|V scratch hoist is valid.
            dimension_semantics=("parallel", "arbitrary"),
            vmem_limit_bytes=vmem_limit),
        cost_estimate=cost,
    )(xq, xkv_b, kmask, wq, bq, wkv, bkv, wo, bo, gamma, beta)

    return out[:, :Sq] if Sq_pad != Sq else out


def ffn_sublayer(x, ffn_params, ln_params, *, eps=_EPS):
    """LayerNorm(x + PositionwiseFeedForward(x)) (eval-mode dropout == identity)."""
    B, S, D = x.shape
    Dff = ffn_params["w1"].shape[1]

    vmem_limit = _vmem_limit_bytes()
    TQ, S_pad = _choose_q_tile(S, vmem_limit)
    if S_pad != S:
        x = jnp.pad(x, ((0, 0), (0, S_pad - S), (0, 0)))
    TF = _choose_ff_tile(Dff)
    n_qt, n_ff = S_pad // TQ, Dff // TF

    w1 = ffn_params["w1"].astype(jnp.bfloat16)
    w2 = ffn_params["w2"].astype(jnp.bfloat16)
    b1, b2 = ffn_params["b1"], ffn_params["b2"]
    gamma, beta = ln_params["gamma"], ln_params["beta"]

    kernel = functools.partial(_ffn_sublayer_kernel, eps=eps)

    flops = B * S_pad * (2 * D * Dff + 2 * Dff * D)
    bytes_accessed = (4 * 2 * B * S_pad * D + 2 * (w1.size + w2.size) * n_qt * B
                      + 4 * (b1.size + b2.size + gamma.size + beta.size))
    cost = pl.CostEstimate(flops=int(flops), transcendentals=0,
                           bytes_accessed=int(bytes_accessed))

    const = lambda b, qi, f: (0, 0)
    out = pl.pallas_call(
        kernel,
        out_shape=jax.ShapeDtypeStruct((B, S_pad, D), x.dtype),
        grid_spec=pltpu.PrefetchScalarGridSpec(
            num_scalar_prefetch=0,
            grid=(B, n_qt, n_ff),
            in_specs=[
                pl.BlockSpec((None, TQ, D), lambda b, qi, f: (b, qi, 0)),  # x
                pl.BlockSpec((D, TF), lambda b, qi, f: (0, f)),            # w1 chunk
                pl.BlockSpec((1, TF), lambda b, qi, f: (0, f)),            # b1 chunk
                pl.BlockSpec((TF, D), lambda b, qi, f: (f, 0)),            # w2 chunk
                pl.BlockSpec((1, D), const),                               # b2
                pl.BlockSpec((1, D), const),                               # gamma
                pl.BlockSpec((1, D), const),                               # beta
            ],
            out_specs=pl.BlockSpec((None, TQ, D), lambda b, qi, f: (b, qi, 0)),
            scratch_shapes=[pltpu.VMEM((TQ, D), jnp.float32)],             # y accumulator
        ),
        compiler_params=pltpu.CompilerParams(
            dimension_semantics=("parallel", "parallel", "arbitrary"),
            vmem_limit_bytes=vmem_limit),
        cost_estimate=cost,
    )(x, w1, b1, w2, b2, gamma, beta)

    return out[:, :S] if S_pad != S else out


def decoder_layer_forward(x, z, tgt_key_mask, params, *, h, eps=_EPS,
                          run_dead_sublayers=False):
    """DecoderLayer.forward.

    The original PyTorch forward computes sublayer[0] (masked self-attention) and
    sublayer[1] (latent attention) but never reassigns x, so their results do not feed
    the returned value; under jax.jit they would be dead-code-eliminated anyway.  They
    are therefore skipped by default (set run_dead_sublayers=True to execute them, e.g.
    for profiling the attention kernel) and the returned value is LayerNorm(x + FFN(x)),
    numerically identical to the PyTorch module in eval mode.
    """
    if run_dead_sublayers:
        attention_sublayer(x, x, params["self_attn"], params["ln0"],
                           h=h, causal=True, eps=eps)
        attention_sublayer(x, z, params["latent_attn"], params["ln1"],
                           h=h, key_mask=tgt_key_mask, eps=eps)
    return ffn_sublayer(x, params["ffn"], params["ln2"], eps=eps)


# ----------------------------------------------------------------------------
# Pure-JAX references (mirror the kernel's bf16-MXU / f32-accumulate math)
# ----------------------------------------------------------------------------

def _bf16_matmul(a, w_bf16):
    return jnp.einsum("...k,kn->...n", a.astype(jnp.bfloat16), w_bf16,
                      preferred_element_type=jnp.float32)


def _ref_residual_ln(x, y, gamma, beta, eps):
    r = x + y
    mean = jnp.mean(r, axis=-1, keepdims=True)
    d = r - mean
    var = jnp.sum(d * d, axis=-1, keepdims=True) / (r.shape[-1] - 1)
    std = jnp.sqrt(var)
    return gamma * d / (std + eps) + beta


def _ref_attention_sublayer(xq, xkv, p, ln, *, h, eps, key_mask=None, causal=False):
    B, Sq, D = xq.shape
    Skv = xkv.shape[1]
    d_k = D // h
    q = _bf16_matmul(xq, p["wq"].astype(jnp.bfloat16)) + p["bq"]
    kv = _bf16_matmul(xkv, p["wkv"].astype(jnp.bfloat16)) + p["bkv"]
    k, v = kv[..., :D], kv[..., D:]

    qh = q.reshape(B, Sq, h, d_k).transpose(0, 2, 1, 3)
    kh = k.reshape(B, Skv, h, d_k).transpose(0, 2, 1, 3)
    vh = v.reshape(B, Skv, h, d_k).transpose(0, 2, 1, 3)

    scores = jnp.einsum("bhqd,bhkd->bhqk",
                        qh.astype(jnp.bfloat16), kh.astype(jnp.bfloat16),
                        preferred_element_type=jnp.float32) / math.sqrt(d_k)
    keep = jnp.ones((B, 1, Sq, Skv), dtype=bool)
    if key_mask is not None:
        keep = keep & (key_mask[:, None, None, :] > 0)
    if causal:
        keep = keep & jnp.tril(jnp.ones((Sq, Skv), dtype=bool))[None, None]
    scores = jnp.where(keep, scores, _NEG_INF)
    probs = jax.nn.softmax(scores, axis=-1)
    ctx = jnp.einsum("bhqk,bhkd->bhqd",
                     probs.astype(jnp.bfloat16), vh.astype(jnp.bfloat16),
                     preferred_element_type=jnp.float32)
    ctx = ctx.transpose(0, 2, 1, 3).reshape(B, Sq, D)
    y = _bf16_matmul(ctx, p["wo"].astype(jnp.bfloat16)) + p["bo"]
    return _ref_residual_ln(xq, y, ln["gamma"], ln["beta"], eps)


def _ref_ffn_sublayer(x, p, ln, *, eps):
    h1 = jnp.maximum(_bf16_matmul(x, p["w1"].astype(jnp.bfloat16)) + p["b1"], 0.0)
    y = _bf16_matmul(h1, p["w2"].astype(jnp.bfloat16)) + p["b2"]
    return _ref_residual_ln(x, y, ln["gamma"], ln["beta"], eps)


def _ref_decoder_layer(x, z, tgt_key_mask, params, *, h, eps):
    # Only the FFN sublayer feeds the module's return value (see decoder_layer_forward).
    return _ref_ffn_sublayer(x, params["ffn"], params["ln2"], eps=eps)


# ----------------------------------------------------------------------------
# Parameter init (mimics nn.Linear uniform(-1/sqrt(in), 1/sqrt(in)))
# ----------------------------------------------------------------------------

def _init_linear(key, d_in, d_out):
    bound = 1.0 / math.sqrt(d_in)
    kw, kb = jax.random.split(key)
    w = jax.random.uniform(kw, (d_in, d_out), jnp.float32, -bound, bound)
    b = jax.random.uniform(kb, (1, d_out), jnp.float32, -bound, bound)
    return w, b


def _init_params(key, d_model, d_ff):
    keys = jax.random.split(key, 8)

    def attn_params(k0, k1, k2):
        wq, bq = _init_linear(k0, d_model, d_model)
        wkv, bkv = _init_linear(k1, d_model, 2 * d_model)   # K|V fused
        wo, bo = _init_linear(k2, d_model, d_model)
        return dict(wq=wq, bq=bq, wkv=wkv, bkv=bkv, wo=wo, bo=bo)

    def ln_params():
        return dict(gamma=jnp.ones((1, d_model), jnp.float32),
                    beta=jnp.zeros((1, d_model), jnp.float32))

    w1, b1 = _init_linear(keys[6], d_model, d_ff)
    w2, b2 = _init_linear(keys[7], d_ff, d_model)
    return dict(
        self_attn=attn_params(keys[0], keys[1], keys[2]),
        latent_attn=attn_params(keys[3], keys[4], keys[5]),
        ffn=dict(w1=w1, b1=b1, w2=w2, b2=b2),
        ln0=ln_params(), ln1=ln_params(), ln2=ln_params(),
    )


if __name__ == "__main__":
    B, S, Sz, D, H, Dff = 2, 8, 8, 32, 4, 64

    root = jax.random.PRNGKey(0)
    k_params, k_x, k_z = jax.random.split(root, 3)
    params = _init_params(k_params, D, Dff)

    x = jax.random.normal(k_x, (B, S, D), jnp.float32)
    z = jax.random.normal(k_z, (B, Sz, D), jnp.float32)

    # tgt_tri_mask -> in-kernel causal mask; tgt_mask -> key-padding mask [B, Skv].
    tgt_key_mask = jnp.ones((B, Sz), jnp.float32).at[1, Sz - 2:].set(0.0)

    out = decoder_layer_forward(x, z, tgt_key_mask, params, h=H)
    out = jax.block_until_ready(out)
    assert out.shape == (B, S, D)

    tol = dict(atol=2e-2, rtol=2e-2)

    # Validate the attention-sublayer kernel (the module computes-but-discards these).
    sa = attention_sublayer(x, x, params["self_attn"], params["ln0"], h=H, causal=True)
    sa_ref = _ref_attention_sublayer(x, x, params["self_attn"], params["ln0"],
                                     h=H, eps=_EPS, causal=True)
    assert jnp.allclose(sa, sa_ref, **tol), "self-attention sublayer mismatch"

    la = attention_sublayer(x, z, params["latent_attn"], params["ln1"], h=H,
                            key_mask=tgt_key_mask)
    la_ref = _ref_attention_sublayer(x, z, params["latent_attn"], params["ln1"],
                                     h=H, eps=_EPS, key_mask=tgt_key_mask)
    assert jnp.allclose(la, la_ref, **tol), "latent-attention sublayer mismatch"

    # Validate the live output (FFN sublayer == the DecoderLayer return value).
    ff_ref = _ref_ffn_sublayer(x, params["ffn"], params["ln2"], eps=_EPS)
    assert jnp.allclose(out, ff_ref, **tol), "feed-forward sublayer mismatch"

    ref = _ref_decoder_layer(x, z, tgt_key_mask, params, h=H, eps=_EPS)
    assert jnp.allclose(out, ref, **tol), "decoder layer output mismatch"

    print("KERNEL_OK")
</pallas_src>

<mosaic_0001>
module attributes {stable_mosaic.version = 11 : i64} {
  func.func @_ffn_sublayer_kernel(%arg0: i32, %arg1: i32, %arg2: i32, %arg3: memref<1x8x32xf32, #tpu.memory_space<vmem>>, %arg4: memref<32x64xbf16, #tpu.memory_space<vmem>>, %arg5: memref<1x64xf32, #tpu.memory_space<vmem>>, %arg6: memref<64x32xbf16, #tpu.memory_space<vmem>>, %arg7: memref<1x32xf32, #tpu.memory_space<vmem>>, %arg8: memref<1x32xf32, #tpu.memory_space<vmem>>, %arg9: memref<1x32xf32, #tpu.memory_space<vmem>>, %arg10: memref<1x8x32xf32, #tpu.memory_space<vmem>>, %arg11: memref<8x32xf32, #tpu.memory_space<vmem>>) attributes {dimension_semantics = [#tpu.dimension_semantics<parallel>, #tpu.dimension_semantics<parallel>, #tpu.dimension_semantics<arbitrary>], iteration_bounds = array<i64: 2, 1, 1>, scalar_prefetch = 0 : i64, scratch_operands = 1 : i64, tpu.core_type = #tpu.core_type<tc>, window_params = [{transform_indices = @transform_0, window_bounds = array<i64: 1, 8, 32>}, {transform_indices = @transform_1, window_bounds = array<i64: 32, 64>}, {transform_indices = @transform_2, window_bounds = array<i64: 1, 64>}, {transform_indices = @transform_3, window_bounds = array<i64: 64, 32>}, {pipeline_mode = #tpu.pipeline_mode<synchronous>, transform_indices = @transform_4, window_bounds = array<i64: 1, 32>}, {pipeline_mode = #tpu.pipeline_mode<synchronous>, transform_indices = @transform_5, window_bounds = array<i64: 1, 32>}, {pipeline_mode = #tpu.pipeline_mode<synchronous>, transform_indices = @transform_6, window_bounds = array<i64: 1, 32>}, {transform_indices = @transform_7, window_bounds = array<i64: 1, 8, 32>}]} {
    %c0_i32 = arith.constant 0 : i32
    %0 = arith.cmpi eq, %arg2, %c0_i32 : i32
    %1 = arith.extui %0 : i1 to i32
    %c0_i32_0 = arith.constant 0 : i32
    %2 = arith.cmpi ne, %1, %c0_i32_0 : i32
    scf.if %2 {
      %cst_17 = arith.constant 0.000000e+00 : f32
      %22 = vector.broadcast %cst_17 : f32 to vector<8x32xf32>
      %c0_18 = arith.constant 0 : index
      %c0_19 = arith.constant 0 : index
      %23 = vector.load %arg11[%c0_18, %c0_19] : memref<8x32xf32, #tpu.memory_space<vmem>>, vector<8x32xf32>
      tpu.vector_store %arg11[%c0_18, %c0_19], %22 {strides = array<i32>} : memref<8x32xf32, #tpu.memory_space<vmem>>, vector<8x32xf32>,
    } else {
    }
    %c0 = arith.constant 0 : index
    %c0_1 = arith.constant 0 : index
    %c0_2 = arith.constant 0 : index
    %3 = vector.load %arg3[%c0, %c0_1, %c0_2] : memref<1x8x32xf32, #tpu.memory_space<vmem>>, vector<1x8x32xf32>
    %4 = vector.shape_cast %3 : vector<1x8x32xf32> to vector<8x32xf32>
    %5 = arith.truncf %4 : vector<8x32xf32> to vector<8x32xbf16>
    %c0_3 = arith.constant 0 : index
    %c0_4 = arith.constant 0 : index
    %6 = vector.load %arg4[%c0_3, %c0_4] : memref<32x64xbf16, #tpu.memory_space<vmem>>, vector<32x64xbf16>
    %cst = arith.constant dense<0.000000e+00> : vector<8x64xf32>
    %7 = tpu.matmul %5, %6, %cst {dimension_numbers = #tpu.dot_dimension_numbers<[1], [0], [0], [1], [0, 0, 1, 1], [], []>} : vector<8x32xbf16>, vector<32x64xbf16>, vector<8x64xf32> -> vector<8x64xf32>
    %c0_5 = arith.constant 0 : index
    %c0_6 = arith.constant 0 : index
    %8 = vector.load %arg5[%c0_5, %c0_6] : memref<1x64xf32, #tpu.memory_space<vmem>>, vector<1x64xf32>
    %9 = vector.broadcast %8 : vector<1x64xf32> to vector<8x64xf32>
    %10 = arith.addf %7, %9 : vector<8x64xf32>
    %cst_7 = arith.constant 0.000000e+00 : f32
    %11 = vector.broadcast %cst_7 : f32 to vector<8x64xf32>
    %12 = arith.maximumf %10, %11 : vector<8x64xf32>
    %c0_8 = arith.constant 0 : index
    %c0_9 = arith.constant 0 : index
    %13 = vector.load %arg11[%c0_8, %c0_9] : memref<8x32xf32, #tpu.memory_space<vmem>>, vector<8x32xf32>
    %14 = arith.truncf %12 : vector<8x64xf32> to vector<8x64xbf16>
    %c0_10 = arith.constant 0 : index
    %c0_11 = arith.constant 0 : index
    %15 = vector.load %arg6[%c0_10, %c0_11] : memref<64x32xbf16, #tpu.memory_space<vmem>>, vector<64x32xbf16>
    %cst_12 = arith.constant dense<0.000000e+00> : vector<8x32xf32>
    %16 = tpu.matmul %14, %15, %cst_12 {dimension_numbers = #tpu.dot_dimension_numbers<[1], [0], [0], [1], [0, 0, 1, 1], [], []>} : vector<8x64xbf16>, vector<64x32xbf16>, vector<8x32xf32> -> vector<8x32xf32>
    %17 = arith.addf %13, %16 : vector<8x32xf32>
    %c0_13 = arith.constant 0 : index
    %c0_14 = arith.constant 0 : index
    %18 = vector.load %arg11[%c0_13, %c0_14] : memref<8x32xf32, #tpu.memory_space<vmem>>, vector<8x32xf32>
    tpu.vector_store %arg11[%c0_13, %c0_14], %17 {strides = array<i32>} : memref<8x32xf32, #tpu.memory_space<vmem>>, vector<8x32xf32>,
    %c0_i32_15 = arith.constant 0 : i32
    %19 = arith.cmpi eq, %arg2, %c0_i32_15 : i32
    %20 = arith.extui %19 : i1 to i32
    %c0_i32_16 = arith.constant 0 : i32
    %21 = arith.cmpi ne, %20, %c0_i32_16 : i32
    scf.if %21 {
      %c0_17 = arith.constant 0 : index
      %c0_18 = arith.constant 0 : index
      %22 = vector.load %arg11[%c0_17, %c0_18] : memref<8x32xf32, #tpu.memory_space<vmem>>, vector<8x32xf32>
      %c0_19 = arith.constant 0 : index
      %c0_20 = arith.constant 0 : index
      %23 = vector.load %arg7[%c0_19, %c0_20] : memref<1x32xf32, #tpu.memory_space<vmem>>, vector<1x32xf32>
      %24 = vector.broadcast %23 : vector<1x32xf32> to vector<8x32xf32>
      %25 = arith.addf %22, %24 : vector<8x32xf32>
      %c0_21 = arith.constant 0 : index
      %c0_22 = arith.constant 0 : index
      %26 = vector.load %arg8[%c0_21, %c0_22] : memref<1x32xf32, #tpu.memory_space<vmem>>, vector<1x32xf32>
      %c0_23 = arith.constant 0 : index
      %c0_24 = arith.constant 0 : index
      %27 = vector.load %arg9[%c0_23, %c0_24] : memref<1x32xf32, #tpu.memory_space<vmem>>, vector<1x32xf32>
      %28 = arith.addf %4, %25 : vector<8x32xf32>
      %cst_25 = arith.constant dense<0.000000e+00> : vector<8xf32>
      %29 = vector.multi_reduction <add>, %28, %cst_25 [1] : vector<8x32xf32> to vector<8xf32>
      %30 = vector.shape_cast %29 : vector<8xf32> to vector<8x1xf32>
      %cst_26 = arith.constant 3.200000e+01 : f32
      %31 = vector.broadcast %cst_26 : f32 to vector<8x1xf32>
      %32 = arith.divf %30, %31 : vector<8x1xf32>
      %33 = vector.broadcast %32 : vector<8x1xf32> to vector<8x32xf32>
      %34 = arith.subf %28, %33 : vector<8x32xf32>
      %35 = arith.mulf %34, %34 : vector<8x32xf32>
      %cst_27 = arith.constant dense<0.000000e+00> : vector<8xf32>
      %36 = vector.multi_reduction <add>, %35, %cst_27 [1] : vector<8x32xf32> to vector<8xf32>
      %37 = vector.shape_cast %36 : vector<8xf32> to vector<8x1xf32>
      %cst_28 = arith.constant 3.100000e+01 : f32
      %38 = vector.broadcast %cst_28 : f32 to vector<8x1xf32>
      %39 = arith.divf %37, %38 : vector<8x1xf32>
      %40 = math.sqrt %39 : vector<8x1xf32>
      %cst_29 = arith.constant 9.99999997E-7 : f32
      %41 = vector.broadcast %cst_29 : f32 to vector<8x1xf32>
      %42 = arith.addf %40, %41 : vector<8x1xf32>
      %43 = tpu.reciprocal %42 {approx = true} : vector<8x1xf32> -> vector<8x1xf32>
      %44 = vector.broadcast %26 : vector<1x32xf32> to vector<8x32xf32>
      %45 = arith.mulf %44, %34 : vector<8x32xf32>
      %46 = vector.broadcast %43 : vector<8x1xf32> to vector<8x32xf32>
      %47 = arith.mulf %45, %46 : vector<8x32xf32>
      %48 = vector.broadcast %27 : vector<1x32xf32> to vector<8x32xf32>
      %49 = arith.addf %47, %48 : vector<8x32xf32>
      %c0_30 = arith.constant 0 : index
      %c0_31 = arith.constant 0 : index
      %c0_32 = arith.constant 0 : index
      %50 = vector.load %arg10[%c0_30, %c0_31, %c0_32] : memref<1x8x32xf32, #tpu.memory_space<vmem>>, vector<1x8x32xf32>
      %51 = vector.shape_cast %50 : vector<1x8x32xf32> to vector<8x32xf32>
      %52 = vector.shape_cast %49 : vector<8x32xf32> to vector<1x8x32xf32>
      tpu.vector_store %arg10[%c0_30, %c0_31, %c0_32], %52 {strides = array<i32>} : memref<1x8x32xf32, #tpu.memory_space<vmem>>, vector<1x8x32xf32>,
    } else {
    }
    return
  }
  func.func @transform_0(%arg0: i32, %arg1: i32, %arg2: i32) -> (i32, i32, i32) {
    %c0_i32 = arith.constant 0 : i32
    %c0_i32_0 = arith.constant 0 : i32
    return %arg0, %arg1, %c0_i32 : i32, i32, i32
  }
  func.func @transform_1(%arg0: i32, %arg1: i32, %arg2: i32) -> (i32, i32) {
    %c0_i32 = arith.constant 0 : i32
    %c0_i32_0 = arith.constant 0 : i32
    return %c0_i32, %arg2 : i32, i32
  }
  func.func @transform_2(%arg0: i32, %arg1: i32, %arg2: i32) -> (i32, i32) {
    %c0_i32 = arith.constant 0 : i32
    %c0_i32_0 = arith.constant 0 : i32
    return %c0_i32, %arg2 : i32, i32
  }
  func.func @transform_3(%arg0: i32, %arg1: i32, %arg2: i32) -> (i32, i32) {
    %c0_i32 = arith.constant 0 : i32
    %c0_i32_0 = arith.constant 0 : i32
    return %arg2, %c0_i32 : i32, i32
  }
  func.func @transform_4(%arg0: i32, %arg1: i32, %arg2: i32) -> (i32, i32) {
    %c0_i32 = arith.constant 0 : i32
    %c0_i32_0 = arith.constant 0 : i32
    %c0_i32_1 = arith.constant 0 : i32
    return %c0_i32, %c0_i32_0 : i32, i32
  }
  func.func @transform_5(%arg0: i32, %arg1: i32, %arg2: i32) -> (i32, i32) {
    %c0_i32 = arith.constant 0 : i32
    %c0_i32_0 = arith.constant 0 : i32
    %c0_i32_1 = arith.constant 0 : i32
    return %c0_i32, %c0_i32_0 : i32, i32
  }
  func.func @transform_6(%arg0: i32, %arg1: i32, %arg2: i32) -> (i32, i32) {
    %c0_i32 = arith.constant 0 : i32
    %c0_i32_0 = arith.constant 0 : i32
    %c0_i32_1 = arith.constant 0 : i32
    return %c0_i32, %c0_i32_0 : i32, i32
  }
  func.func @transform_7(%arg0: i32, %arg1: i32, %arg2: i32) -> (i32, i32, i32) {
    %c0_i32 = arith.constant 0 : i32
    %c0_i32_0 = arith.constant 0 : i32
    return %arg0, %arg1, %c0_i32 : i32, i32, i32
  }
}

</mosaic_0001>

<llo_original>
// kernel: tpu_custom_call.1
$region0: #{tpu_custom_call.1}
  #allocation0 [shape = 'u32[]', space=smem, size = 0x4, offset = 0x4, fixed_abs, tag = 'smem constant byte address 0x4 - core index']
  #allocation1 [shape = 'u32[72,128]{1,0:T(1,128)}', space=vmem, size = 0x9000, scoped, tag = 'internal scratch']
  #allocation2 [shape = 'f32[8,32]{1,0:T(8,128)}', space=vmem, size = 0x1000, scoped, tag = 'scratch operand']
  %s0 = inlined_call_operand.vmem [shape: f32[2,8,32], index: 0, kind: input, shape index: {}]
  %s1 = inlined_call_operand.vmem [shape: bf16[32,64], index: 1, kind: input, shape index: {}]
  %s2 = inlined_call_operand.vmem [shape: f32[1,64], index: 2, kind: input, shape index: {}]
  %s3 = inlined_call_operand.vmem [shape: bf16[64,32], index: 3, kind: input, shape index: {}]
  %s4 = inlined_call_operand.vmem [shape: f32[1,32], index: 4, kind: input, shape index: {}]
  %s5 = inlined_call_operand.vmem [shape: f32[1,32], index: 5, kind: input, shape index: {}]
  %s6 = inlined_call_operand.vmem [shape: f32[1,32], index: 6, kind: input, shape index: {}]
  %s7 = inlined_call_operand.hbm [shape: f32[2,8,32], index: 7, kind: output, shape index: {}]
  %s8 = sld [smem:[#allocation0]]
  $region69: #{tpu_custom_call.1} parent=0
    _
  %s10 = ssub.s32 1, %s8
  %s11 = scalar_select 0, %s10, %s8
  $region1: #{tpu_custom_call.1} parent=0
    #allocation3 [shape = 'u8[8192]{0}', space=vmem, size = 0x2000, scoped, tag = 'output window, operand 0']
    #allocation4 [shape = 's32[2]{0}', space=sflag, size = 0x8, scoped, tag = 'scoped memory for tpu_custom_call.1']
    %12 = vsyncpa [#allocation4], 0
    %s13 = scalar_lea.sflag [#allocation4], 1
    %14 = vsyncpa %s13, 0
    loop: start=0, step=1, limit=4
    $region2: #{tpu_custom_call.1} parent=1 // loop_pre_header
      _
    $region3: #{tpu_custom_call.1} parent=1 // loop_header
      %s16 = sphi 0, %s20
      %p17 = scmp.ge.s32.totalorder %s16, 4
      %s23 = sphi 0, %s42
      %s24 = sphi 0, %s38
      %s25 = sphi 0, %s34
      %s26 = sphi 0, %s23
      %s27 = sphi 0, %s24
      %s28 = sphi 0, %s25
      %s29 = sphi 0, %s26
      %s30 = sphi 0, %s27
      %s31 = sphi 0, %s28
      %s47 = sphi 0, %s49
      %s50 = sphi 0, %s47
      %s51 = sphi 0, %s50
      %s67 = sphi 0, %s51
      %s73 = sphi 0, %s75
      %s76 = sphi 0, %s73
      %s77 = sphi 0, %s76
      %s93 = sphi 0, %s77
      %s99 = sphi 0, %s101
      %s102 = sphi 0, %s99
      %s103 = sphi 0, %s102
      %s119 = sphi 0, %s103
      %s125 = sphi 0, %s127
      %s128 = sphi 0, %s125
      %s129 = sphi 0, %s128
      %s145 = sphi 0, %s129
      %s149 = sphi 0, %s149
      %s151 = sphi 0, %s149
      %s152 = sphi 0, %s151
      %s166 = sphi 0, %s152
      %s170 = sphi 0, %s170
      %s172 = sphi 0, %s170
      %s173 = sphi 0, %s172
      %s187 = sphi 0, %s173
      %s191 = sphi 0, %s191
      %s193 = sphi 0, %s191
      %s194 = sphi 0, %s193
      %s208 = sphi 0, %s194
      %s216 = sphi 0, %s218
      %s219 = sphi 0, %s216
      %s220 = sphi 0, %s219
      %s236 = sphi 0, %s220
    $region4: #{tpu_custom_call.1} parent=1 // loop_header_branch
      %19 = sbr.rel (%p17) target = $region8
    $region5: #{tpu_custom_call.1} parent=1 // loop_body
      %s21 = ssub.s32 %s16, 1
      %s22 = ssub.s32 %s16, 2
      %s32 = sadd.s32 1, %s25
      %p33 = scmp.ge.s32.totalorder %s32, 1
      %s34 = scalar_select %p33, 0, %s32
      %s35 = sadd.s32 1, %s24
      %s36 = scalar_select %p33, %s35, %s24
      %p37 = scmp.ge.s32.totalorder %s36, 1
      %s38 = scalar_select %p37, 0, %s36
      %s39 = sadd.s32 1, %s23
      %s40 = scalar_select %p37, %s39, %s23
      %p41 = scmp.ge.s32.totalorder %s40, 2
      %s42 = scalar_select %p41, 0, %s40
      %s43 = ssub.s32 %s23, %s42
      %s44 = ssub.s32 %s24, %s38
      %s45 = sor.u32 %s43, %s44
      %p46 = scmp.eq.s32.totalorder %s45, 0
      %s48 = sadd.s32 %s47, 1
      %s49 = scalar_select %p46, %s47, %s48
      %p52 = pneg %p46
      %p53 = scmp.eq.s32.totalorder %s16, 1
      %p54 = por %p52, %p53
      %p55 = scmp.ne.s32.totalorder %s47, %s50
      %p56 = scmp.eq.s32.totalorder %s16, 0
      %p57 = por %p55, %p56
      %p58 = scmp.ne.s32.totalorder %s47, %s50
      %p59 = scmp.eq.s32.totalorder %s21, 1
      %p60 = por %p58, %p59
      %p61 = scmp.ne.s32.totalorder %s50, %s51
      %p62 = scmp.eq.s32.totalorder %s21, 0
      %p63 = por %p61, %p62
      %p64 = scmp.ne.s32.totalorder %s50, %s51
      %p65 = scmp.eq.s32.totalorder %s22, 1
      %p66 = por %p64, %p65
      %p68 = scmp.ne.s32.totalorder %s51, %s67
      %p69 = scmp.eq.s32.totalorder %s22, 0
      %p70 = por %p68, %p69
      %s71 = ssub.s32 %s25, %s34
      %p72 = scmp.eq.s32.totalorder %s71, 0
      %s74 = sadd.s32 %s73, 1
      %s75 = scalar_select %p72, %s73, %s74
      %p78 = pneg %p72
      %p79 = scmp.eq.s32.totalorder %s16, 1
      %p80 = por %p78, %p79
      %p81 = scmp.ne.s32.totalorder %s73, %s76
      %p82 = scmp.eq.s32.totalorder %s16, 0
      %p83 = por %p81, %p82
      %p84 = scmp.ne.s32.totalorder %s73, %s76
      %p85 = scmp.eq.s32.totalorder %s21, 1
      %p86 = por %p84, %p85
      %p87 = scmp.ne.s32.totalorder %s76, %s77
      %p88 = scmp.eq.s32.totalorder %s21, 0
      %p89 = por %p87, %p88
      %p90 = scmp.ne.s32.totalorder %s76, %s77
      %p91 = scmp.eq.s32.totalorder %s22, 1
      %p92 = por %p90, %p91
      %p94 = scmp.ne.s32.totalorder %s77, %s93
      %p95 = scmp.eq.s32.totalorder %s22, 0
      %p96 = por %p94, %p95
      %s97 = ssub.s32 %s25, %s34
      %p98 = scmp.eq.s32.totalorder %s97, 0
      %s100 = sadd.s32 %s99, 1
      %s101 = scalar_select %p98, %s99, %s100
      %p104 = pneg %p98
      %p105 = scmp.eq.s32.totalorder %s16, 1
      %p106 = por %p104, %p105
      %p107 = scmp.ne.s32.totalorder %s99, %s102
      %p108 = scmp.eq.s32.totalorder %s16, 0
      %p109 = por %p107, %p108
      %p110 = scmp.ne.s32.totalorder %s99, %s102
      %p111 = scmp.eq.s32.totalorder %s21, 1
      %p112 = por %p110, %p111
      %p113 = scmp.ne.s32.totalorder %s102, %s103
      %p114 = scmp.eq.s32.totalorder %s21, 0
      %p115 = por %p113, %p114
      %p116 = scmp.ne.s32.totalorder %s102, %s103
      %p117 = scmp.eq.s32.totalorder %s22, 1
      %p118 = por %p116, %p117
      %p120 = scmp.ne.s32.totalorder %s103, %s119
      %p121 = scmp.eq.s32.totalorder %s22, 0
      %p122 = por %p120, %p121
      %s123 = ssub.s32 %s25, %s34
      %p124 = scmp.eq.s32.totalorder %s123, 0
      %s126 = sadd.s32 %s125, 1
      %s127 = scalar_select %p124, %s125, %s126
      %p130 = pneg %p124
      %p131 = scmp.eq.s32.totalorder %s16, 1
      %p132 = por %p130, %p131
      %p133 = scmp.ne.s32.totalorder %s125, %s128
      %p134 = scmp.eq.s32.totalorder %s16, 0
      %p135 = por %p133, %p134
      %p136 = scmp.ne.s32.totalorder %s125, %s128
      %p137 = scmp.eq.s32.totalorder %s21, 1
      %p138 = por %p136, %p137
      %p139 = scmp.ne.s32.totalorder %s128, %s129
      %p140 = scmp.eq.s32.totalorder %s21, 0
      %p141 = por %p139, %p140
      %p142 = scmp.ne.s32.totalorder %s128, %s129
      %p143 = scmp.eq.s32.totalorder %s22, 1
      %p144 = por %p142, %p143
      %p146 = scmp.ne.s32.totalorder %s129, %s145
      %p147 = scmp.eq.s32.totalorder %s22, 0
      %p148 = por %p146, %p147
      %s150 = sadd.s32 %s149, 1
      %p153 = scmp.eq.s32.totalorder %s16, 1
      %p154 = scmp.ne.s32.totalorder %s149, %s151
      %p155 = scmp.eq.s32.totalorder %s16, 0
      %p156 = por %p154, %p155
      %p157 = scmp.ne.s32.totalorder %s149, %s151
      %p158 = scmp.eq.s32.totalorder %s21, 1
      %p159 = por %p157, %p158
      %p160 = scmp.ne.s32.totalorder %s151, %s152
      %p161 = scmp.eq.s32.totalorder %s21, 0
      %p162 = por %p160, %p161
      %p163 = scmp.ne.s32.totalorder %s151, %s152
      %p164 = scmp.eq.s32.totalorder %s22, 1
      %p165 = por %p163, %p164
      %p167 = scmp.ne.s32.totalorder %s152, %s166
      %p168 = scmp.eq.s32.totalorder %s22, 0
      %p169 = por %p167, %p168
      %s171 = sadd.s32 %s170, 1
      %p174 = scmp.eq.s32.totalorder %s16, 1
      %p175 = scmp.ne.s32.totalorder %s170, %s172
      %p176 = scmp.eq.s32.totalorder %s16, 0
      %p177 = por %p175, %p176
      %p178 = scmp.ne.s32.totalorder %s170, %s172
      %p179 = scmp.eq.s32.totalorder %s21, 1
      %p180 = por %p178, %p179
      %p181 = scmp.ne.s32.totalorder %s172, %s173
      %p182 = scmp.eq.s32.totalorder %s21, 0
      %p183 = por %p181, %p182
      %p184 = scmp.ne.s32.totalorder %s172, %s173
      %p185 = scmp.eq.s32.totalorder %s22, 1
      %p186 = por %p184, %p185
      %p188 = scmp.ne.s32.totalorder %s173, %s187
      %p189 = scmp.eq.s32.totalorder %s22, 0
      %p190 = por %p188, %p189
      %s192 = sadd.s32 %s191, 1
      %p195 = scmp.eq.s32.totalorder %s16, 1
      %p196 = scmp.ne.s32.totalorder %s191, %s193
      %p197 = scmp.eq.s32.totalorder %s16, 0
      %p198 = por %p196, %p197
      %p199 = scmp.ne.s32.totalorder %s191, %s193
      %p200 = scmp.eq.s32.totalorder %s21, 1
      %p201 = por %p199, %p200
      %p202 = scmp.ne.s32.totalorder %s193, %s194
      %p203 = scmp.eq.s32.totalorder %s21, 0
      %p204 = por %p202, %p203
      %p205 = scmp.ne.s32.totalorder %s193, %s194
      %p206 = scmp.eq.s32.totalorder %s22, 1
      %p207 = por %p205, %p206
      %p209 = scmp.ne.s32.totalorder %s194, %s208
      %p210 = scmp.eq.s32.totalorder %s22, 0
      %p211 = por %p209, %p210
      %s212 = ssub.s32 %s23, %s42
      %s213 = ssub.s32 %s24, %s38
      %s214 = sor.u32 %s212, %s213
      %p215 = scmp.eq.s32.totalorder %s214, 0
      %s217 = sadd.s32 %s216, 1
      %s218 = scalar_select %p215, %s216, %s217
      %p221 = pneg %p215
      %p222 = scmp.eq.s32.totalorder %s16, 1
      %p223 = por %p221, %p222
      %p224 = scmp.ne.s32.totalorder %s216, %s219
      %p225 = scmp.eq.s32.totalorder %s16, 0
      %p226 = por %p224, %p225
      %p227 = scmp.ne.s32.totalorder %s216, %s219
      %p228 = scmp.eq.s32.totalorder %s21, 1
      %p229 = por %p227, %p228
      %p230 = scmp.ne.s32.totalorder %s219, %s220
      %p231 = scmp.eq.s32.totalorder %s21, 0
      %p232 = por %p230, %p231
      %p233 = scmp.ne.s32.totalorder %s219, %s220
      %p234 = scmp.eq.s32.totalorder %s22, 1
      %p235 = por %p233, %p234
      %p237 = scmp.ne.s32.totalorder %s220, %s236
      %p238 = scmp.eq.s32.totalorder %s22, 0
      %p239 = por %p237, %p238
      %p240 = scmp.le.s32.totalorder 1, %s16
      %p241 = scmp.lt.s32.totalorder %s16, 3
      %p242 = pnand %p240, %p241
      %p243 = pneg %p242
      // Predicated region
      $region9: #{tpu_custom_call.1} parent=5 // pred_check
        _
      $region10: #{tpu_custom_call.1} parent=5 // pred_check_branch
        %245 = sbr.rel (%p242) target = $region12
      $region11: #{tpu_custom_call.1} parent=5 // pred_region
        %s246 = ssub.s32 %s16, 1
        // Predicated region
        $region13: #{tpu_custom_call.1} parent=11 // pred_check
          %p247 = pneg %p89
        $region14: #{tpu_custom_call.1} parent=11 // pred_check_branch
          %249 = sbr.rel (%p247) target = $region16
        $region15: #{tpu_custom_call.1} parent=11 // pred_region
          %p250 = scmp.lt.s32.totalorder %s28, 0
          %s251 = scalar_select %p250, %s28, 0
          %s252 = smul.addr %s251, 4
          %s253 = scalar_lea.vmem %s1, %s252
        $region16: #{tpu_custom_call.1} parent=11 // pred_fallthru
          _
        // Predicated region
        $region17: #{tpu_custom_call.1} parent=11 // pred_check
          %p254 = pneg %p115
        $region18: #{tpu_custom_call.1} parent=11 // pred_check_branch
          %256 = sbr.rel (%p254) target = $region20
        $region19: #{tpu_custom_call.1} parent=11 // pred_region
          %p257 = scmp.lt.s32.totalorder %s28, 0
          %s258 = scalar_select %p257, %s28, 0
          %s259 = scalar_lea.vmem %s2, %s258
        $region20: #{tpu_custom_call.1} parent=11 // pred_fallthru
          _
        // Predicated region
        $region21: #{tpu_custom_call.1} parent=11 // pred_check
          %p260 = pneg %p141
        $region22: #{tpu_custom_call.1} parent=11 // pred_check_branch
          %262 = sbr.rel (%p260) target = $region24
        $region23: #{tpu_custom_call.1} parent=11 // pred_region
          %s263 = smul.u32 8, %s28
          %p264 = scmp.lt.s32.totalorder %s263, 7
          %s265 = scalar_select %p264, %s263, 7
          %s266 = smul.addr %s265, 4
          %s267 = scalar_lea.vmem %s3, %s266
          %s268 = smul.u32 8, %s28
        $region24: #{tpu_custom_call.1} parent=11 // pred_fallthru
          _
        // Predicated region
        $region25: #{tpu_custom_call.1} parent=11 // pred_check
          %p269 = pneg %p162
        $region26: #{tpu_custom_call.1} parent=11 // pred_check_branch
          %271 = sbr.rel (%p269) target = $region28
        $region27: #{tpu_custom_call.1} parent=11 // pred_region
          _
        $region28: #{tpu_custom_call.1} parent=11 // pred_fallthru
          _
        // Predicated region
        $region29: #{tpu_custom_call.1} parent=11 // pred_check
          %p272 = pneg %p183
        $region30: #{tpu_custom_call.1} parent=11 // pred_check_branch
          %274 = sbr.rel (%p272) target = $region32
        $region31: #{tpu_custom_call.1} parent=11 // pred_region
          _
        $region32: #{tpu_custom_call.1} parent=11 // pred_fallthru
          _
        // Predicated region
        $region33: #{tpu_custom_call.1} parent=11 // pred_check
          %p275 = pneg %p204
        $region34: #{tpu_custom_call.1} parent=11 // pred_check_branch
          %277 = sbr.rel (%p275) target = $region36
        $region35: #{tpu_custom_call.1} parent=11 // pred_region
          _
        $region36: #{tpu_custom_call.1} parent=11 // pred_fallthru
          _
      $region12: #{tpu_custom_call.1} parent=5 // pred_fallthru
        _
      %p278 = scmp.lt.s32.totalorder %s16, 2
      // Predicated region
      $region37: #{tpu_custom_call.1} parent=5 // pred_check
        %p279 = pneg %p278
      $region38: #{tpu_custom_call.1} parent=5 // pred_check_branch
        %281 = sbr.rel (%p279) target = $region40
      $region39: #{tpu_custom_call.1} parent=5 // pred_region
        // Predicated region
        $region41: #{tpu_custom_call.1} parent=39 // pred_check
          %p282 = pneg %p57
        $region42: #{tpu_custom_call.1} parent=39 // pred_check_branch
          %284 = sbr.rel (%p282) target = $region44
        $region43: #{tpu_custom_call.1} parent=39 // pred_region
          %p285 = scmp.lt.s32.totalorder %s23, 1
          %s286 = scalar_select %p285, %s23, 1
          %p287 = scmp.lt.s32.totalorder %s24, 0
          %s288 = scalar_select %p287, %s24, 0
          %s289 = sadd.s32 %s288, %s286
          %s290 = smul.addr %s289, 8
          %s291 = scalar_lea.vmem %s0, %s290
        $region44: #{tpu_custom_call.1} parent=39 // pred_fallthru
          _
      $region40: #{tpu_custom_call.1} parent=5 // pred_fallthru
        _
      %p292 = scmp.le.s32.totalorder 1, %s16
      %p293 = scmp.lt.s32.totalorder %s16, 3
      %p294 = pnand %p292, %p293
      %p295 = pneg %p294
      // Predicated region
      $region45: #{tpu_custom_call.1} parent=5 // pred_check
        _
      $region46: #{tpu_custom_call.1} parent=5 // pred_check_branch
        %297 = sbr.rel (%p294) target = $region48
      $region47: #{tpu_custom_call.1} parent=5 // pred_region
        %s298 = ssub.s32 %s16, 1
        %p299 = scmp.lt.s32.totalorder %s26, 1
        %s300 = scalar_select %p299, %s26, 1
        %p301 = scmp.lt.s32.totalorder %s27, 0
        %s302 = scalar_select %p301, %s27, 0
        %s303 = sadd.s32 %s302, %s300
        %s304 = smul.addr %s303, 8
        %s305 = scalar_lea.vmem %s0, %s304
        %p306 = pneg %p63
        %p307 = pneg %p60
        %p308 = scmp.lt.s32.totalorder %s28, 0
        %s309 = scalar_select %p308, %s28, 0
        %s310 = smul.addr %s309, 4
        %s311 = scalar_lea.vmem %s1, %s310
        %p312 = pneg %p89
        %p313 = pneg %p86
        %p314 = scmp.lt.s32.totalorder %s28, 0
        %s315 = scalar_select %p314, %s28, 0
        %s316 = scalar_lea.vmem %s2, %s315
        %p317 = pneg %p115
        %p318 = pneg %p112
        %s319 = smul.u32 8, %s28
        %p320 = scmp.lt.s32.totalorder %s319, 7
        %s321 = scalar_select %p320, %s319, 7
        %s322 = smul.addr %s321, 4
        %s323 = scalar_lea.vmem %s3, %s322
        %p324 = pneg %p141
        %p325 = pneg %p138
        %p326 = pneg %p162
        %p327 = pneg %p159
        %p328 = pneg %p183
        %p329 = pneg %p180
        %p330 = pneg %p204
        %p331 = pneg %p201
        %p332 = pneg %p232
        %p333 = pneg %p229
        %s334 = sand.u32 %s219, 1
        %s335 = scalar_lea.sflag [#allocation4], %s334
        %s336 = sand.u32 %s219, 1
        %s337 = smul.addr %s336, 8
        %s338 = scalar_lea.vmem [#allocation3], %s337
        %p339 = scmp.lt.s32.totalorder %s26, 1
        %s340 = scalar_select %p339, %s26, 1
        %p341 = scmp.lt.s32.totalorder %s27, 0
        %s342 = scalar_select %p341, %s27, 0
        %s343 = sadd.s32 %s342, %s340
        %s344 = smul.addr %s343, 8
        %s345 = scalar_lea.vmem %s0, %s344
        %p346 = scmp.lt.s32.totalorder %s28, 0
        %s347 = scalar_select %p346, %s28, 0
        %s348 = smul.addr %s347, 4
        %s349 = scalar_lea.vmem %s1, %s348
        %p350 = scmp.lt.s32.totalorder %s28, 0
        %s351 = scalar_select %p350, %s28, 0
        %s352 = scalar_lea.vmem %s2, %s351
        %s353 = smul.u32 8, %s28
        %p354 = scmp.lt.s32.totalorder %s353, 7
        %s355 = scalar_select %p354, %s353, 7
        %s356 = smul.addr %s355, 4
        %s357 = scalar_lea.vmem %s3, %s356
        %s358 = smul.u32 8, %s28
        %p360 = scmp.eq.s32.totalorder %s28, 0
        // Predicated region
        $region49: #{tpu_custom_call.1} parent=47 // pred_check
          %p361 = pneg %p360
        $region50: #{tpu_custom_call.1} parent=47 // pred_check_branch
          %363 = sbr.rel (%p361) target = $region52
        $region51: #{tpu_custom_call.1} parent=47 // pred_region
          %vm364 = vcmask 261120
          %365 = vst.msk [vmem:[#allocation2] sm:$0xff] %vm364, 0.0
        $region52: #{tpu_custom_call.1} parent=47 // pred_fallthru
          _
        %v366 = vld [vmem:[%s345] sm:$0xff]
        %v367 = vpack.c.bf16 %v366, %v366
        %v368 = vld [vmem:[%s349] sm:$0xf]
        %v369 = vld [vmem:[%s349 + $0x4] sm:$0xf]
        %v370 = vld [vmem:[%s349 + $0x8] sm:$0xf]
        %v371 = vld [vmem:[%s349 + $0xc] sm:$0xf]
        %v372 = vld [vmem:[%s352] sm:$0x1]
        %v374 = vperm.slane %v372, 0
        %v380 = vunpack.c.l.b16 %v368
        %v381 = vunpack.c.l.b16 %v369
        %v382 = vunpack.c.l.b16 %v370
        %v383 = vunpack.c.l.b16 %v371
        %v384 = vpack.c.b16 %v381, %v380
        %v385 = vpack.c.b16 %v383, %v382
        %vm388 = vcmask 261120
        %v390 = vsel %vm388, %v367, 0
        %392 = vmatpush.bf16.msra.mxu0 0
        %393 = vmatpush.bf16.msra.mxu0 0
        %394 = vmatpush.bf16.msra.mxu0 0
        %395 = vmatpush.bf16.msra.mxu0 0
        %396 = vmatpush.bf16.msra.mxu0 0
        %397 = vmatpush.bf16.msra.mxu0 0
        %398 = vmatpush.bf16.msra.mxu0 %v385
        %399 = vmatpush.bf16.msra.mxu0 %v384
        %400 = vmatmul.bf16.gmra.mxu0 %v390
        %v401 = vpop.f32.mrf.mxu0
        %v402 = vadd.f32 %v374, %v401
        %v403 = vpop.f32.mrf.mxu0
        %404 = vdwg.mxu0
        %v405 = vmax.f32 %v402, 0.0
        %v406 = vld [vmem:[#allocation2] sm:$0xff]
        %v407 = vpack.c.bf16 %v405, %v405
        %v408 = vld [vmem:[%s357] sm:$0xf]
        %v409 = vld [vmem:[%s357 + $0x4] sm:$0xf]
        %v410 = vld [vmem:[%s357 + $0x8] sm:$0xf]
        %v411 = vld [vmem:[%s357 + $0xc] sm:$0xf]
        %v412 = vld [vmem:[%s357 + $0x10] sm:$0xf]
        %v413 = vld [vmem:[%s357 + $0x14] sm:$0xf]
        %v414 = vld [vmem:[%s357 + $0x18] sm:$0xf]
        %v415 = vld [vmem:[%s357 + $0x1c] sm:$0xf]
        %v424 = vunpack.c.l.b16 %v408
        %v425 = vunpack.c.l.b16 %v409
        %v426 = vunpack.c.l.b16 %v410
        %v427 = vunpack.c.l.b16 %v411
        %v428 = vunpack.c.l.b16 %v412
        %v429 = vunpack.c.l.b16 %v413
        %v430 = vunpack.c.l.b16 %v414
        %v431 = vunpack.c.l.b16 %v415
        %v432 = vpack.c.b16 %v425, %v424
        %v433 = vpack.c.b16 %v427, %v426
        %v434 = vpack.c.b16 %v429, %v428
        %v435 = vpack.c.b16 %v431, %v430
        %vm440 = vcmask 523264
        %v442 = vsel %vm440, %v407, 0
        %444 = vmatpush.bf16.msra.mxu0 0
        %445 = vmatpush.bf16.msra.mxu0 0
        %446 = vmatpush.bf16.msra.mxu0 0
        %447 = vmatpush.bf16.msra.mxu0 0
        %448 = vmatpush.bf16.msra.mxu0 %v435
        %449 = vmatpush.bf16.msra.mxu0 %v434
        %450 = vmatpush.bf16.msra.mxu0 %v433
        %451 = vmatpush.bf16.msra.mxu0 %v432
        %452 = vmatmul.bf16.gmra.mxu0 %v442
        %v453 = vpop.f32.mrf.mxu0
        %v454 = vadd.f32 0.0, %v453
        %v455 = vpop.f32.mrf.mxu0
        %456 = vdwg.mxu0
        %v457 = vadd.f32 %v406, %v454
        %458 = vst.msk [vmem:[#allocation2] sm:$0xff] %vm388, %v457
        // Predicated region
        $region53: #{tpu_custom_call.1} parent=47 // pred_check
          %p459 = pneg %p360
        $region54: #{tpu_custom_call.1} parent=47 // pred_check_branch
          %461 = sbr.rel (%p459) target = $region56
        $region55: #{tpu_custom_call.1} parent=47 // pred_region
          %v462 = vld [vmem:[#allocation2] sm:$0xff]
          %v463 = vld [vmem:[%s4] sm:$0x1]
          %v465 = vperm.slane %v463, 0
          %v467 = vadd.f32 %v462, %v465
          %v468 = vld [vmem:[%s5] sm:$0x1]
          %v469 = vld [vmem:[%s6] sm:$0x1]
          %v470 = vadd.f32 %v366, %v467
          %v471 = vsel %vm388, %v470, 0.0
          %472 = vadd.xlane.f32.xlu0 %v471
          %v473 = vpop.xlane.xlu0 %472
          %v474 = vrcp.pop 32.0
          %v475 = vmul.f32 32.0, %v474
          %v476 = vsub.f32 1.0, %v475
          %v477 = vmul.f32 %v474, %v476
          %v478 = vadd.f32 %v474, %v477
          %vm479 = vweird.f32 %v474
          %v480 = vsel %vm479, %v474, %v478
          %v481 = vmul.f32 %v473, %v480
          %v482 = vsub.f32 %v470, %v481
          %v483 = vmul.f32 %v482, %v482
          %v484 = vsel %vm388, %v483, 0.0
          %485 = vadd.xlane.f32.xlu0 %v484
          %v486 = vpop.xlane.xlu0 %485
          %v487 = vrcp.pop 31.0
          %v488 = vmul.f32 31.0, %v487
          %v489 = vsub.f32 1.0, %v488
          %v490 = vmul.f32 %v487, %v489
          %v491 = vadd.f32 %v487, %v490
          %vm492 = vweird.f32 %v487
          %v493 = vsel %vm492, %v487, %v491
          %v494 = vmul.f32 %v486, %v493
          %v495 = vrsqrt.pop %v494
          %v496 = vmul.f32 %v495, %v494
          %v497 = vmul.f32 %v496, %v495
          %v498 = vmul.f32 0.5, %v497
          %v499 = vsub.f32 1.5, %v498
          %v500 = vmul.f32 %v495, %v499
          %v501 = vmul.f32 %v494, %v500
          %vm502 = vcmp.eq.f32.partialorder %v494, inf
          %v503 = vsel %vm502, %v494, %v501
          %vm504 = vcmp.eq.f32.partialorder %v494, 0.0
          %v505 = vand.u32 %v494, 2147483648
          %v506 = vsel %vm504, %v505, %v503
          %v507 = vadd.f32 %v506, 1e-06
          %v508 = vrcp.pop %v507
          %v510 = vperm.slane %v468, 0
          %v512 = vmul.f32 %v510, %v482
          %v513 = vmul.f32 %v512, %v508
          %v515 = vperm.slane %v469, 0
          %v517 = vadd.f32 %v513, %v515
          %518 = vst.msk [vmem:[%s338] sm:$0xff] %vm388, %v517
        $region56: #{tpu_custom_call.1} parent=47 // pred_fallthru
          _
        %s519 = sand.u32 %s219, 1
        %s520 = scalar_lea.sflag [#allocation4], %s519
        %s521 = sand.u32 %s219, 1
        %s522 = smul.addr %s521, 8
        %s523 = scalar_lea.vmem [#allocation3], %s522
        // Predicated region
        $region57: #{tpu_custom_call.1} parent=47 // pred_check
          %p524 = pneg %p229
        $region58: #{tpu_custom_call.1} parent=47 // pred_check_branch
          %526 = sbr.rel (%p524) target = $region60
        $region59: #{tpu_custom_call.1} parent=47 // pred_region
          %528 = vsyncadd %s520, 0
          %s529 = sadd.s32 %s27, %s26
          %s530 = smul.addr %s529, 8
          %s531 = scalar_lea.hbm %s7, %s530
          %s533 = sshll.u32 %s523, 4
          %s534 = int_to_ptr.vmem [resolvable:$true] %s533
          %s535 = sshll.u32 %s531, 4
          %s536 = int_to_ptr.hbm [resolvable:$true] %s535
          %538 = dma.vmem_to_hbm [thread:$0]  %s534, 128, %s536, %s520
        $region60: #{tpu_custom_call.1} parent=47 // pred_fallthru
          _
      $region48: #{tpu_custom_call.1} parent=5 // pred_fallthru
        _
      %p539 = scmp.le.s32.totalorder 2, %s16
      // Predicated region
      $region61: #{tpu_custom_call.1} parent=5 // pred_check
        %p540 = pneg %p539
      $region62: #{tpu_custom_call.1} parent=5 // pred_check_branch
        %542 = sbr.rel (%p540) target = $region64
      $region63: #{tpu_custom_call.1} parent=5 // pred_region
        %s543 = ssub.s32 %s16, 2
        // Predicated region
        $region65: #{tpu_custom_call.1} parent=63 // pred_check
          %p544 = pneg %p235
        $region66: #{tpu_custom_call.1} parent=63 // pred_check_branch
          %546 = sbr.rel (%p544) target = $region68
        $region67: #{tpu_custom_call.1} parent=63 // pred_region
          %s547 = sand.u32 %s220, 1
          %s548 = scalar_lea.sflag [#allocation4], %s547
          %s549 = sand.u32 %s220, 1
          %s550 = smul.addr %s549, 8
          %s551 = scalar_lea.vmem [#allocation3], %s550
          %553 = dma.done %s548, 128
        $region68: #{tpu_custom_call.1} parent=63 // pred_fallthru
          _
      $region64: #{tpu_custom_call.1} parent=5 // pred_fallthru
        _
    $region6: #{tpu_custom_call.1} parent=1 // loop_footer
      %s20 = sadd.s32 1, %s16
    $region7: #{tpu_custom_call.1} parent=1 // loop_footer_branch
      %15 = sbr.rel target = $region3
    $region8: #{tpu_custom_call.1} parent=1 // loop_exit
      _
    %554 = vsyncpa [#allocation4], 1
    %s555 = scalar_lea.sflag [#allocation4], 1
    %556 = vsyncpa %s555, 1

</llo_original>
